<compile_context>
chip_gen: v7x
topology: tpu7x:2x2x1
jax: 0.10.0
libtpu: 0.0.40
codegen_flags: <defaults>
</compile_context>

<pallas_src>
import functools

import numpy as np
import jax
import jax.numpy as jnp
from jax.experimental import pallas as pl
from jax.experimental.pallas import tpu as pltpu

_LANE = 128
_EPS = 1e-5


def _round_up(x, m):
    return ((x + m - 1) // m) * m


def _fused_conv_ln_gelu_kernel(p_ref, w_ref, b_ref, g_ref, beta_ref, o_ref,
                               *, cout_true):
    # conv-as-matmul on the MXU: bf16 operands, f32 accumulation.
    y = jnp.dot(p_ref[...], w_ref[...], preferred_element_type=jnp.float32)
    y = y + b_ref[...]
    # LayerNorm over the *true* channel count.  Padded output lanes of y are
    # exactly 0 (zero-padded weight columns and bias), so full-lane sums equal
    # true-channel sums and only the divisor must use the real Cout.
    inv_c = jnp.float32(1.0 / cout_true)
    mean = jnp.sum(y, axis=-1, keepdims=True) * inv_c
    mean_sq = jnp.sum(y * y, axis=-1, keepdims=True) * inv_c
    var = jnp.maximum(mean_sq - mean * mean, 0.0)
    yn = (y - mean) * jax.lax.rsqrt(var + _EPS)
    yn = yn * g_ref[...] + beta_ref[...]          # padded lanes: gamma=beta=0 -> 0
    # exact (erf) GELU, matching torch.nn.GELU() default
    gelu = 0.5 * yn * (1.0 + jax.lax.erf(yn * jnp.float32(0.7071067811865476)))
    o_ref[...] = gelu.astype(o_ref.dtype)


def _im2col(x_nhwc, k=3, stride=2, pad=1):
    """3x3 / stride-2 / pad-1 patches -> [N*Ho*Wo, k*k*C] in (kh, kw, c) order."""
    # TODO(synk): fuse the im2col into the kernel (halo DMA over the padded NHWC
    # input + 9 accumulated per-tap matmuls) to avoid the 9x patch replication
    # through HBM; kept in the wrapper here for robust lowering.
    N, H, W, C = x_nhwc.shape
    xpad = jnp.pad(x_nhwc, ((0, 0), (pad, pad), (pad, pad), (0, 0)))
    Ho = (H + 2 * pad - k) // stride + 1
    Wo = (W + 2 * pad - k) // stride + 1
    cols = []
    for kh in range(k):
        for kw in range(k):
            cols.append(
                xpad[:, kh:kh + stride * Ho:stride, kw:kw + stride * Wo:stride, :])
    patches = jnp.stack(cols, axis=3)  # [N, Ho, Wo, k*k, C]
    return patches.reshape(N * Ho * Wo, k * k * C), Ho, Wo


def _fused_stage(patches, w_mat, bias, gamma, beta, *, out_dtype=jnp.float32,
                 tm_cap=1024):
    """Fused (conv-as-matmul + bias + LayerNorm + GELU) over im2col patches."""
    M, K = patches.shape
    cout = w_mat.shape[1]
    cp = _round_up(cout, _LANE)          # lane-dense output width (>=128)

    # Row tile: large to amortize per-grid-step overhead, multiple of 8, capped
    # around M/2 so the grid length stays >= 2 (feeds both v7x TensorCores).
    tm = min(tm_cap, _round_up(max(pl.cdiv(M, 2), 1), 8))
    mp = _round_up(M, tm)

    # bf16 MXU operands (accumulation stays f32 inside the kernel).
    patches_p = jnp.pad(patches, ((0, mp - M), (0, 0))).astype(jnp.bfloat16)
    w_p = jnp.pad(w_mat, ((0, 0), (0, cp - cout))).astype(jnp.bfloat16)
    bias_p = jnp.pad(bias, (0, cp - cout)).reshape(1, cp).astype(jnp.float32)
    gamma_p = jnp.pad(gamma, (0, cp - cout)).reshape(1, cp).astype(jnp.float32)
    beta_p = jnp.pad(beta, (0, cp - cout)).reshape(1, cp).astype(jnp.float32)

    kernel = functools.partial(_fused_conv_ln_gelu_kernel, cout_true=cout)
    out = pl.pallas_call(
        kernel,
        out_shape=jax.ShapeDtypeStruct((mp, cp), out_dtype),
        grid_spec=pltpu.PrefetchScalarGridSpec(
            num_scalar_prefetch=0,
            grid=(mp // tm,),
            in_specs=[
                pl.BlockSpec((tm, K), lambda i: (i, 0)),    # patch row tile
                pl.BlockSpec((K, cp), lambda i: (0, 0)),    # conv weight (full)
                pl.BlockSpec((1, cp), lambda i: (0, 0)),    # conv bias
                pl.BlockSpec((1, cp), lambda i: (0, 0)),    # LN gamma
                pl.BlockSpec((1, cp), lambda i: (0, 0)),    # LN beta
            ],
            out_specs=pl.BlockSpec((tm, cp), lambda i: (i, 0)),
        ),
        compiler_params=pltpu.CompilerParams(
            dimension_semantics=("parallel",)),
    )(patches_p, w_p, bias_p, gamma_p, beta_p)

    return out[:M, :cout]


def stem_layer_forward(x_nchw, params):
    """Pallas implementation of StemLayer.forward. Input/output are NCHW."""
    x = jnp.transpose(x_nchw, (0, 2, 3, 1))  # -> NHWC
    N = x.shape[0]

    # stage 1: conv1 -> ln1 -> gelu  (intermediate kept bf16: it is cast to bf16
    # for the stage-2 MXU anyway, so this adds no error and halves its traffic)
    p1, ho1, wo1 = _im2col(x)
    w1 = jnp.transpose(params["conv1_w"], (2, 3, 1, 0)).reshape(
        -1, params["conv1_w"].shape[0])  # [kh*kw*Cin, Cout], matches patch order
    y1 = _fused_stage(p1, w1, params["conv1_b"], params["ln1_g"],
                      params["ln1_b"], out_dtype=jnp.bfloat16)
    y1 = y1.reshape(N, ho1, wo1, -1)

    # stage 2: conv2 -> ln2 -> gelu
    p2, ho2, wo2 = _im2col(y1)
    w2 = jnp.transpose(params["conv2_w"], (2, 3, 1, 0)).reshape(
        -1, params["conv2_w"].shape[0])
    y2 = _fused_stage(p2, w2, params["conv2_b"], params["ln2_g"],
                      params["ln2_b"], out_dtype=jnp.float32)
    y2 = y2.reshape(N, ho2, wo2, -1)

    return jnp.transpose(y2, (0, 3, 1, 2))  # -> NCHW


def _reference(x_nchw, params):
    """Plain-JAX f32 reference (mirrors the PyTorch forward)."""
    def conv(x, w, b):
        y = jax.lax.conv_general_dilated(
            x, w, window_strides=(2, 2), padding=((1, 1), (1, 1)),
            dimension_numbers=("NCHW", "OIHW", "NCHW"))
        return y + b[None, :, None, None]

    def ln(x, g, b):
        x = jnp.transpose(x, (0, 2, 3, 1))
        m = jnp.mean(x, -1, keepdims=True)
        v = jnp.mean(jnp.square(x - m), -1, keepdims=True)
        x = (x - m) / jnp.sqrt(v + _EPS) * g + b
        return jnp.transpose(x, (0, 3, 1, 2))

    x = conv(x_nchw, params["conv1_w"], params["conv1_b"])
    x = jax.nn.gelu(ln(x, params["ln1_g"], params["ln1_b"]), approximate=False)
    x = conv(x, params["conv2_w"], params["conv2_b"])
    x = jax.nn.gelu(ln(x, params["ln2_g"], params["ln2_b"]), approximate=False)
    return x


if __name__ == "__main__":
    # Small deterministic config: batch=2, in_chans=3, spatial=16, stem_channels=32
    in_chans, stem_channels = 3, 32
    c_mid, c_out = stem_channels // 2, stem_channels
    N, H, W = 2, 16, 16

    key = jax.random.PRNGKey(0)
    ks = jax.random.split(key, 9)
    params = {
        "conv1_w": 0.1 * jax.random.normal(ks[0], (c_mid, in_chans, 3, 3), jnp.float32),
        "conv1_b": 0.1 * jax.random.normal(ks[1], (c_mid,), jnp.float32),
        "ln1_g": 1.0 + 0.1 * jax.random.normal(ks[2], (c_mid,), jnp.float32),
        "ln1_b": 0.1 * jax.random.normal(ks[3], (c_mid,), jnp.float32),
        "conv2_w": 0.1 * jax.random.normal(ks[4], (c_out, c_mid, 3, 3), jnp.float32),
        "conv2_b": 0.1 * jax.random.normal(ks[5], (c_out,), jnp.float32),
        "ln2_g": 1.0 + 0.1 * jax.random.normal(ks[6], (c_out,), jnp.float32),
        "ln2_b": 0.1 * jax.random.normal(ks[7], (c_out,), jnp.float32),
    }
    x = jax.random.normal(ks[8], (N, in_chans, H, W), jnp.float32)

    out = jax.block_until_ready(jax.jit(stem_layer_forward)(x, params))
    assert out.shape == (N, c_out, H // 4, W // 4), out.shape

    ref = jax.block_until_ready(_reference(x, params))
    # Tolerance accounts for bf16 MXU operands / bf16 intermediate vs. f32 reference.
    np.testing.assert_allclose(np.asarray(out), np.asarray(ref), rtol=3e-2, atol=3e-2)

    print("KERNEL_OK")
</pallas_src>

<mosaic_0001>
module attributes {stable_mosaic.version = 11 : i64} {
  func.func @_fused_conv_ln_gelu_kernel(%arg0: i32, %arg1: memref<64x27xbf16, #tpu.memory_space<vmem>>, %arg2: memref<27x128xbf16, #tpu.memory_space<vmem>>, %arg3: memref<1x128xf32, #tpu.memory_space<vmem>>, %arg4: memref<1x128xf32, #tpu.memory_space<vmem>>, %arg5: memref<1x128xf32, #tpu.memory_space<vmem>>, %arg6: memref<64x128xbf16, #tpu.memory_space<vmem>>) attributes {dimension_semantics = [#tpu.dimension_semantics<parallel>], iteration_bounds = array<i64: 2>, scalar_prefetch = 0 : i64, scratch_operands = 0 : i64, tpu.core_type = #tpu.core_type<tc>, window_params = [{transform_indices = @transform_0, window_bounds = array<i64: 64, 27>}, {pipeline_mode = #tpu.pipeline_mode<synchronous>, transform_indices = @transform_1, window_bounds = array<i64: 27, 128>}, {pipeline_mode = #tpu.pipeline_mode<synchronous>, transform_indices = @transform_2, window_bounds = array<i64: 1, 128>}, {pipeline_mode = #tpu.pipeline_mode<synchronous>, transform_indices = @transform_3, window_bounds = array<i64: 1, 128>}, {pipeline_mode = #tpu.pipeline_mode<synchronous>, transform_indices = @transform_4, window_bounds = array<i64: 1, 128>}, {transform_indices = @transform_5, window_bounds = array<i64: 64, 128>}]} {
    %c0 = arith.constant 0 : index
    %c0_0 = arith.constant 0 : index
    %0 = vector.load %arg1[%c0, %c0_0] : memref<64x27xbf16, #tpu.memory_space<vmem>>, vector<64x27xbf16>
    %c0_1 = arith.constant 0 : index
    %c0_2 = arith.constant 0 : index
    %1 = vector.load %arg2[%c0_1, %c0_2] : memref<27x128xbf16, #tpu.memory_space<vmem>>, vector<27x128xbf16>
    %cst = arith.constant dense<0.000000e+00> : vector<64x128xf32>
    %2 = tpu.matmul %0, %1, %cst {dimension_numbers = #tpu.dot_dimension_numbers<[1], [0], [0], [1], [0, 0, 1, 1], [], []>} : vector<64x27xbf16>, vector<27x128xbf16>, vector<64x128xf32> -> vector<64x128xf32>
    %c0_3 = arith.constant 0 : index
    %c0_4 = arith.constant 0 : index
    %3 = vector.load %arg3[%c0_3, %c0_4] : memref<1x128xf32, #tpu.memory_space<vmem>>, vector<1x128xf32>
    %4 = vector.broadcast %3 : vector<1x128xf32> to vector<64x128xf32>
    %5 = arith.addf %2, %4 : vector<64x128xf32>
    %cst_5 = arith.constant dense<0.000000e+00> : vector<64xf32>
    %6 = vector.multi_reduction <add>, %5, %cst_5 [1] : vector<64x128xf32> to vector<64xf32>
    %7 = vector.shape_cast %6 : vector<64xf32> to vector<64x1xf32>
    %cst_6 = arith.constant 6.250000e-02 : f32
    %8 = vector.broadcast %cst_6 : f32 to vector<64x1xf32>
    %9 = arith.mulf %7, %8 : vector<64x1xf32>
    %10 = arith.mulf %5, %5 : vector<64x128xf32>
    %cst_7 = arith.constant dense<0.000000e+00> : vector<64xf32>
    %11 = vector.multi_reduction <add>, %10, %cst_7 [1] : vector<64x128xf32> to vector<64xf32>
    %12 = vector.shape_cast %11 : vector<64xf32> to vector<64x1xf32>
    %cst_8 = arith.constant 6.250000e-02 : f32
    %13 = vector.broadcast %cst_8 : f32 to vector<64x1xf32>
    %14 = arith.mulf %12, %13 : vector<64x1xf32>
    %15 = arith.mulf %9, %9 : vector<64x1xf32>
    %16 = arith.subf %14, %15 : vector<64x1xf32>
    %cst_9 = arith.constant 0.000000e+00 : f32
    %17 = vector.broadcast %cst_9 : f32 to vector<64x1xf32>
    %18 = arith.maximumf %16, %17 : vector<64x1xf32>
    %19 = vector.broadcast %9 : vector<64x1xf32> to vector<64x128xf32>
    %20 = arith.subf %5, %19 : vector<64x128xf32>
    %cst_10 = arith.constant 9.99999974E-6 : f32
    %21 = vector.broadcast %cst_10 : f32 to vector<64x1xf32>
    %22 = arith.addf %18, %21 : vector<64x1xf32>
    %23 = math.rsqrt %22 : vector<64x1xf32>
    %24 = vector.broadcast %23 : vector<64x1xf32> to vector<64x128xf32>
    %25 = arith.mulf %20, %24 : vector<64x128xf32>
    %c0_11 = arith.constant 0 : index
    %c0_12 = arith.constant 0 : index
    %26 = vector.load %arg4[%c0_11, %c0_12] : memref<1x128xf32, #tpu.memory_space<vmem>>, vector<1x128xf32>
    %27 = vector.broadcast %26 : vector<1x128xf32> to vector<64x128xf32>
    %28 = arith.mulf %25, %27 : vector<64x128xf32>
    %c0_13 = arith.constant 0 : index
    %c0_14 = arith.constant 0 : index
    %29 = vector.load %arg5[%c0_13, %c0_14] : memref<1x128xf32, #tpu.memory_space<vmem>>, vector<1x128xf32>
    %30 = vector.broadcast %29 : vector<1x128xf32> to vector<64x128xf32>
    %31 = arith.addf %28, %30 : vector<64x128xf32>
    %cst_15 = arith.constant 5.000000e-01 : f32
    %32 = vector.broadcast %cst_15 : f32 to vector<64x128xf32>
    %33 = arith.mulf %32, %31 : vector<64x128xf32>
    %cst_16 = arith.constant 0.707106769 : f32
    %34 = vector.broadcast %cst_16 : f32 to vector<64x128xf32>
    %35 = arith.mulf %31, %34 : vector<64x128xf32>
    %36 = math.erf %35 : vector<64x128xf32>
    %cst_17 = arith.constant 1.000000e+00 : f32
    %37 = vector.broadcast %cst_17 : f32 to vector<64x128xf32>
    %38 = arith.addf %37, %36 : vector<64x128xf32>
    %39 = arith.mulf %33, %38 : vector<64x128xf32>
    %40 = arith.truncf %39 : vector<64x128xf32> to vector<64x128xbf16>
    %c0_18 = arith.constant 0 : index
    %c0_19 = arith.constant 0 : index
    %41 = vector.load %arg6[%c0_18, %c0_19] : memref<64x128xbf16, #tpu.memory_space<vmem>>, vector<64x128xbf16>
    tpu.vector_store %arg6[%c0_18, %c0_19], %40 {strides = array<i32>} : memref<64x128xbf16, #tpu.memory_space<vmem>>, vector<64x128xbf16>,
    return
  }
  func.func @transform_0(%arg0: i32) -> (i32, i32) {
    %c0_i32 = arith.constant 0 : i32
    %c0_i32_0 = arith.constant 0 : i32
    return %arg0, %c0_i32 : i32, i32
  }
  func.func @transform_1(%arg0: i32) -> (i32, i32) {
    %c0_i32 = arith.constant 0 : i32
    %c0_i32_0 = arith.constant 0 : i32
    %c0_i32_1 = arith.constant 0 : i32
    return %c0_i32, %c0_i32_0 : i32, i32
  }
  func.func @transform_2(%arg0: i32) -> (i32, i32) {
    %c0_i32 = arith.constant 0 : i32
    %c0_i32_0 = arith.constant 0 : i32
    %c0_i32_1 = arith.constant 0 : i32
    return %c0_i32, %c0_i32_0 : i32, i32
  }
  func.func @transform_3(%arg0: i32) -> (i32, i32) {
    %c0_i32 = arith.constant 0 : i32
    %c0_i32_0 = arith.constant 0 : i32
    %c0_i32_1 = arith.constant 0 : i32
    return %c0_i32, %c0_i32_0 : i32, i32
  }
  func.func @transform_4(%arg0: i32) -> (i32, i32) {
    %c0_i32 = arith.constant 0 : i32
    %c0_i32_0 = arith.constant 0 : i32
    %c0_i32_1 = arith.constant 0 : i32
    return %c0_i32, %c0_i32_0 : i32, i32
  }
  func.func @transform_5(%arg0: i32) -> (i32, i32) {
    %c0_i32 = arith.constant 0 : i32
    %c0_i32_0 = arith.constant 0 : i32
    return %arg0, %c0_i32 : i32, i32
  }
}

module attributes {stable_mosaic.version = 11 : i64} {
  func.func @_fused_conv_ln_gelu_kernel(%arg0: i32, %arg1: memref<16x144xbf16, #tpu.memory_space<vmem>>, %arg2: memref<144x128xbf16, #tpu.memory_space<vmem>>, %arg3: memref<1x128xf32, #tpu.memory_space<vmem>>, %arg4: memref<1x128xf32, #tpu.memory_space<vmem>>, %arg5: memref<1x128xf32, #tpu.memory_space<vmem>>, %arg6: memref<16x128xf32, #tpu.memory_space<vmem>>) attributes {dimension_semantics = [#tpu.dimension_semantics<parallel>], iteration_bounds = array<i64: 2>, scalar_prefetch = 0 : i64, scratch_operands = 0 : i64, tpu.core_type = #tpu.core_type<tc>, window_params = [{transform_indices = @transform_0, window_bounds = array<i64: 16, 144>}, {pipeline_mode = #tpu.pipeline_mode<synchronous>, transform_indices = @transform_1, window_bounds = array<i64: 144, 128>}, {pipeline_mode = #tpu.pipeline_mode<synchronous>, transform_indices = @transform_2, window_bounds = array<i64: 1, 128>}, {pipeline_mode = #tpu.pipeline_mode<synchronous>, transform_indices = @transform_3, window_bounds = array<i64: 1, 128>}, {pipeline_mode = #tpu.pipeline_mode<synchronous>, transform_indices = @transform_4, window_bounds = array<i64: 1, 128>}, {transform_indices = @transform_5, window_bounds = array<i64: 16, 128>}]} {
    %c0 = arith.constant 0 : index
    %c0_0 = arith.constant 0 : index
    %0 = vector.load %arg1[%c0, %c0_0] : memref<16x144xbf16, #tpu.memory_space<vmem>>, vector<16x144xbf16>
    %c0_1 = arith.constant 0 : index
    %c0_2 = arith.constant 0 : index
    %1 = vector.load %arg2[%c0_1, %c0_2] : memref<144x128xbf16, #tpu.memory_space<vmem>>, vector<144x128xbf16>
    %cst = arith.constant dense<0.000000e+00> : vector<16x128xf32>
    %2 = tpu.matmul %0, %1, %cst {dimension_numbers = #tpu.dot_dimension_numbers<[1], [0], [0], [1], [0, 0, 1, 1], [], []>} : vector<16x144xbf16>, vector<144x128xbf16>, vector<16x128xf32> -> vector<16x128xf32>
    %c0_3 = arith.constant 0 : index
    %c0_4 = arith.constant 0 : index
    %3 = vector.load %arg3[%c0_3, %c0_4] : memref<1x128xf32, #tpu.memory_space<vmem>>, vector<1x128xf32>
    %4 = vector.broadcast %3 : vector<1x128xf32> to vector<16x128xf32>
    %5 = arith.addf %2, %4 : vector<16x128xf32>
    %cst_5 = arith.constant dense<0.000000e+00> : vector<16xf32>
    %6 = vector.multi_reduction <add>, %5, %cst_5 [1] : vector<16x128xf32> to vector<16xf32>
    %7 = vector.shape_cast %6 : vector<16xf32> to vector<16x1xf32>
    %cst_6 = arith.constant 3.125000e-02 : f32
    %8 = vector.broadcast %cst_6 : f32 to vector<16x1xf32>
    %9 = arith.mulf %7, %8 : vector<16x1xf32>
    %10 = arith.mulf %5, %5 : vector<16x128xf32>
    %cst_7 = arith.constant dense<0.000000e+00> : vector<16xf32>
    %11 = vector.multi_reduction <add>, %10, %cst_7 [1] : vector<16x128xf32> to vector<16xf32>
    %12 = vector.shape_cast %11 : vector<16xf32> to vector<16x1xf32>
    %cst_8 = arith.constant 3.125000e-02 : f32
    %13 = vector.broadcast %cst_8 : f32 to vector<16x1xf32>
    %14 = arith.mulf %12, %13 : vector<16x1xf32>
    %15 = arith.mulf %9, %9 : vector<16x1xf32>
    %16 = arith.subf %14, %15 : vector<16x1xf32>
    %cst_9 = arith.constant 0.000000e+00 : f32
    %17 = vector.broadcast %cst_9 : f32 to vector<16x1xf32>
    %18 = arith.maximumf %16, %17 : vector<16x1xf32>
    %19 = vector.broadcast %9 : vector<16x1xf32> to vector<16x128xf32>
    %20 = arith.subf %5, %19 : vector<16x128xf32>
    %cst_10 = arith.constant 9.99999974E-6 : f32
    %21 = vector.broadcast %cst_10 : f32 to vector<16x1xf32>
    %22 = arith.addf %18, %21 : vector<16x1xf32>
    %23 = math.rsqrt %22 : vector<16x1xf32>
    %24 = vector.broadcast %23 : vector<16x1xf32> to vector<16x128xf32>
    %25 = arith.mulf %20, %24 : vector<16x128xf32>
    %c0_11 = arith.constant 0 : index
    %c0_12 = arith.constant 0 : index
    %26 = vector.load %arg4[%c0_11, %c0_12] : memref<1x128xf32, #tpu.memory_space<vmem>>, vector<1x128xf32>
    %27 = vector.broadcast %26 : vector<1x128xf32> to vector<16x128xf32>
    %28 = arith.mulf %25, %27 : vector<16x128xf32>
    %c0_13 = arith.constant 0 : index
    %c0_14 = arith.constant 0 : index
    %29 = vector.load %arg5[%c0_13, %c0_14] : memref<1x128xf32, #tpu.memory_space<vmem>>, vector<1x128xf32>
    %30 = vector.broadcast %29 : vector<1x128xf32> to vector<16x128xf32>
    %31 = arith.addf %28, %30 : vector<16x128xf32>
    %cst_15 = arith.constant 5.000000e-01 : f32
    %32 = vector.broadcast %cst_15 : f32 to vector<16x128xf32>
    %33 = arith.mulf %32, %31 : vector<16x128xf32>
    %cst_16 = arith.constant 0.707106769 : f32
    %34 = vector.broadcast %cst_16 : f32 to vector<16x128xf32>
    %35 = arith.mulf %31, %34 : vector<16x128xf32>
    %36 = math.erf %35 : vector<16x128xf32>
    %cst_17 = arith.constant 1.000000e+00 : f32
    %37 = vector.broadcast %cst_17 : f32 to vector<16x128xf32>
    %38 = arith.addf %37, %36 : vector<16x128xf32>
    %39 = arith.mulf %33, %38 : vector<16x128xf32>
    %c0_18 = arith.constant 0 : index
    %c0_19 = arith.constant 0 : index
    %40 = vector.load %arg6[%c0_18, %c0_19] : memref<16x128xf32, #tpu.memory_space<vmem>>, vector<16x128xf32>
    tpu.vector_store %arg6[%c0_18, %c0_19], %39 {strides = array<i32>} : memref<16x128xf32, #tpu.memory_space<vmem>>, vector<16x128xf32>,
    return
  }
  func.func @transform_0(%arg0: i32) -> (i32, i32) {
    %c0_i32 = arith.constant 0 : i32
    %c0_i32_0 = arith.constant 0 : i32
    return %arg0, %c0_i32 : i32, i32
  }
  func.func @transform_1(%arg0: i32) -> (i32, i32) {
    %c0_i32 = arith.constant 0 : i32
    %c0_i32_0 = arith.constant 0 : i32
    %c0_i32_1 = arith.constant 0 : i32
    return %c0_i32, %c0_i32_0 : i32, i32
  }
  func.func @transform_2(%arg0: i32) -> (i32, i32) {
    %c0_i32 = arith.constant 0 : i32
    %c0_i32_0 = arith.constant 0 : i32
    %c0_i32_1 = arith.constant 0 : i32
    return %c0_i32, %c0_i32_0 : i32, i32
  }
  func.func @transform_3(%arg0: i32) -> (i32, i32) {
    %c0_i32 = arith.constant 0 : i32
    %c0_i32_0 = arith.constant 0 : i32
    %c0_i32_1 = arith.constant 0 : i32
    return %c0_i32, %c0_i32_0 : i32, i32
  }
  func.func @transform_4(%arg0: i32) -> (i32, i32) {
    %c0_i32 = arith.constant 0 : i32
    %c0_i32_0 = arith.constant 0 : i32
    %c0_i32_1 = arith.constant 0 : i32
    return %c0_i32, %c0_i32_0 : i32, i32
  }
  func.func @transform_5(%arg0: i32) -> (i32, i32) {
    %c0_i32 = arith.constant 0 : i32
    %c0_i32_0 = arith.constant 0 : i32
    return %arg0, %c0_i32 : i32, i32
  }
}

</mosaic_0001>

<llo_original>
// kernel: stem_layer_forward.2
$region0: #{stem_layer_forward.2}
  #allocation0 [shape = 'u32[]', space=smem, size = 0x4, offset = 0x4, fixed_abs, tag = 'smem constant byte address 0x4 - core index']
  #allocation1 [shape = 'u32[144,128]{1,0:T(1,128)}', space=vmem, size = 0x12000, scoped, tag = 'internal scratch']
  %s0 = inlined_call_operand.vmem [shape: bf16[128,27], index: 0, kind: input, shape index: {}]
  %s1 = inlined_call_operand.vmem [shape: bf16[27,128], index: 1, kind: input, shape index: {}]
  %s2 = inlined_call_operand.vmem [shape: f32[1,128], index: 2, kind: input, shape index: {}]
  %s3 = inlined_call_operand.vmem [shape: f32[1,128], index: 3, kind: input, shape index: {}]
  %s4 = inlined_call_operand.vmem [shape: f32[1,128], index: 4, kind: input, shape index: {}]
  %s5 = inlined_call_operand.vmem [shape: bf16[128,128], index: 5, kind: output, shape index: {}]
  %s6 = sld [smem:[#allocation0]]
  $region53: #{stem_layer_forward.2} parent=0
    _
  %s8 = ssub.s32 1, %s6
  %s9 = scalar_select 0, %s8, %s6
  loop: start=0, step=1, limit=4
  $region2: #{stem_layer_forward.2} parent=0 // loop_pre_header
    _
  $region3: #{stem_layer_forward.2} parent=0 // loop_header
    %s11 = sphi 0, %s15
    %p12 = scmp.ge.s32.totalorder %s11, 4
    %s21 = sphi 0, %s23
    %s24 = sphi 0, %s21
    %s25 = sphi 0, %s24
    %s41 = sphi 0, %s25
    %s45 = sphi 0, %s45
    %s47 = sphi 0, %s45
    %s48 = sphi 0, %s47
    %s62 = sphi 0, %s48
    %s66 = sphi 0, %s66
    %s68 = sphi 0, %s66
    %s69 = sphi 0, %s68
    %s83 = sphi 0, %s69
    %s87 = sphi 0, %s87
    %s89 = sphi 0, %s87
    %s90 = sphi 0, %s89
    %s104 = sphi 0, %s90
    %s108 = sphi 0, %s108
    %s110 = sphi 0, %s108
    %s111 = sphi 0, %s110
    %s125 = sphi 0, %s111
    %s131 = sphi 0, %s133
    %s134 = sphi 0, %s131
    %s135 = sphi 0, %s134
    %s151 = sphi 0, %s135
  $region4: #{stem_layer_forward.2} parent=0 // loop_header_branch
    %14 = sbr.rel (%p12) target = $region8
  $region5: #{stem_layer_forward.2} parent=0 // loop_body
    %s16 = ssub.s32 %s11, 1
    %s17 = ssub.s32 %s11, 2
    %s18 = sadd.s32 %s11, 1
    %s19 = ssub.s32 %s11, %s18
    %p20 = scmp.eq.s32.totalorder %s19, 0
    %s22 = sadd.s32 %s21, 1
    %s23 = scalar_select %p20, %s21, %s22
    %p26 = pneg %p20
    %p27 = scmp.eq.s32.totalorder %s11, 1
    %p28 = por %p26, %p27
    %p29 = scmp.ne.s32.totalorder %s21, %s24
    %p30 = scmp.eq.s32.totalorder %s11, 0
    %p31 = por %p29, %p30
    %p32 = scmp.ne.s32.totalorder %s21, %s24
    %p33 = scmp.eq.s32.totalorder %s16, 1
    %p34 = por %p32, %p33
    %p35 = scmp.ne.s32.totalorder %s24, %s25
    %p36 = scmp.eq.s32.totalorder %s16, 0
    %p37 = por %p35, %p36
    %p38 = scmp.ne.s32.totalorder %s24, %s25
    %p39 = scmp.eq.s32.totalorder %s17, 1
    %p40 = por %p38, %p39
    %p42 = scmp.ne.s32.totalorder %s25, %s41
    %p43 = scmp.eq.s32.totalorder %s17, 0
    %p44 = por %p42, %p43
    %s46 = sadd.s32 %s45, 1
    %p49 = scmp.eq.s32.totalorder %s11, 1
    %p50 = scmp.ne.s32.totalorder %s45, %s47
    %p51 = scmp.eq.s32.totalorder %s11, 0
    %p52 = por %p50, %p51
    %p53 = scmp.ne.s32.totalorder %s45, %s47
    %p54 = scmp.eq.s32.totalorder %s16, 1
    %p55 = por %p53, %p54
    %p56 = scmp.ne.s32.totalorder %s47, %s48
    %p57 = scmp.eq.s32.totalorder %s16, 0
    %p58 = por %p56, %p57
    %p59 = scmp.ne.s32.totalorder %s47, %s48
    %p60 = scmp.eq.s32.totalorder %s17, 1
    %p61 = por %p59, %p60
    %p63 = scmp.ne.s32.totalorder %s48, %s62
    %p64 = scmp.eq.s32.totalorder %s17, 0
    %p65 = por %p63, %p64
    %s67 = sadd.s32 %s66, 1
    %p70 = scmp.eq.s32.totalorder %s11, 1
    %p71 = scmp.ne.s32.totalorder %s66, %s68
    %p72 = scmp.eq.s32.totalorder %s11, 0
    %p73 = por %p71, %p72
    %p74 = scmp.ne.s32.totalorder %s66, %s68
    %p75 = scmp.eq.s32.totalorder %s16, 1
    %p76 = por %p74, %p75
    %p77 = scmp.ne.s32.totalorder %s68, %s69
    %p78 = scmp.eq.s32.totalorder %s16, 0
    %p79 = por %p77, %p78
    %p80 = scmp.ne.s32.totalorder %s68, %s69
    %p81 = scmp.eq.s32.totalorder %s17, 1
    %p82 = por %p80, %p81
    %p84 = scmp.ne.s32.totalorder %s69, %s83
    %p85 = scmp.eq.s32.totalorder %s17, 0
    %p86 = por %p84, %p85
    %s88 = sadd.s32 %s87, 1
    %p91 = scmp.eq.s32.totalorder %s11, 1
    %p92 = scmp.ne.s32.totalorder %s87, %s89
    %p93 = scmp.eq.s32.totalorder %s11, 0
    %p94 = por %p92, %p93
    %p95 = scmp.ne.s32.totalorder %s87, %s89
    %p96 = scmp.eq.s32.totalorder %s16, 1
    %p97 = por %p95, %p96
    %p98 = scmp.ne.s32.totalorder %s89, %s90
    %p99 = scmp.eq.s32.totalorder %s16, 0
    %p100 = por %p98, %p99
    %p101 = scmp.ne.s32.totalorder %s89, %s90
    %p102 = scmp.eq.s32.totalorder %s17, 1
    %p103 = por %p101, %p102
    %p105 = scmp.ne.s32.totalorder %s90, %s104
    %p106 = scmp.eq.s32.totalorder %s17, 0
    %p107 = por %p105, %p106
    %s109 = sadd.s32 %s108, 1
    %p112 = scmp.eq.s32.totalorder %s11, 1
    %p113 = scmp.ne.s32.totalorder %s108, %s110
    %p114 = scmp.eq.s32.totalorder %s11, 0
    %p115 = por %p113, %p114
    %p116 = scmp.ne.s32.totalorder %s108, %s110
    %p117 = scmp.eq.s32.totalorder %s16, 1
    %p118 = por %p116, %p117
    %p119 = scmp.ne.s32.totalorder %s110, %s111
    %p120 = scmp.eq.s32.totalorder %s16, 0
    %p121 = por %p119, %p120
    %p122 = scmp.ne.s32.totalorder %s110, %s111
    %p123 = scmp.eq.s32.totalorder %s17, 1
    %p124 = por %p122, %p123
    %p126 = scmp.ne.s32.totalorder %s111, %s125
    %p127 = scmp.eq.s32.totalorder %s17, 0
    %p128 = por %p126, %p127
    %s129 = ssub.s32 %s11, %s18
    %p130 = scmp.eq.s32.totalorder %s129, 0
    %s132 = sadd.s32 %s131, 1
    %s133 = scalar_select %p130, %s131, %s132
    %p136 = pneg %p130
    %p137 = scmp.eq.s32.totalorder %s11, 1
    %p138 = por %p136, %p137
    %p139 = scmp.ne.s32.totalorder %s131, %s134
    %p140 = scmp.eq.s32.totalorder %s11, 0
    %p141 = por %p139, %p140
    %p142 = scmp.ne.s32.totalorder %s131, %s134
    %p143 = scmp.eq.s32.totalorder %s16, 1
    %p144 = por %p142, %p143
    %p145 = scmp.ne.s32.totalorder %s134, %s135
    %p146 = scmp.eq.s32.totalorder %s16, 0
    %p147 = por %p145, %p146
    %p148 = scmp.ne.s32.totalorder %s134, %s135
    %p149 = scmp.eq.s32.totalorder %s17, 1
    %p150 = por %p148, %p149
    %p152 = scmp.ne.s32.totalorder %s135, %s151
    %p153 = scmp.eq.s32.totalorder %s17, 0
    %p154 = por %p152, %p153
    %p155 = scmp.le.s32.totalorder 1, %s11
    %p156 = scmp.lt.s32.totalorder %s11, 3
    %p157 = pnand %p155, %p156
    %p158 = pneg %p157
    // Predicated region
    $region9: #{stem_layer_forward.2} parent=5 // pred_check
      _
    $region10: #{stem_layer_forward.2} parent=5 // pred_check_branch
      %160 = sbr.rel (%p157) target = $region12
    $region11: #{stem_layer_forward.2} parent=5 // pred_region
      %s161 = ssub.s32 %s11, 1
      // Predicated region
      $region13: #{stem_layer_forward.2} parent=11 // pred_check
        %p162 = pneg %p58
      $region14: #{stem_layer_forward.2} parent=11 // pred_check_branch
        %164 = sbr.rel (%p162) target = $region16
      $region15: #{stem_layer_forward.2} parent=11 // pred_region
        _
      $region16: #{stem_layer_forward.2} parent=11 // pred_fallthru
        _
      // Predicated region
      $region17: #{stem_layer_forward.2} parent=11 // pred_check
        %p165 = pneg %p79
      $region18: #{stem_layer_forward.2} parent=11 // pred_check_branch
        %167 = sbr.rel (%p165) target = $region20
      $region19: #{stem_layer_forward.2} parent=11 // pred_region
        _
      $region20: #{stem_layer_forward.2} parent=11 // pred_fallthru
        _
      // Predicated region
      $region21: #{stem_layer_forward.2} parent=11 // pred_check
        %p168 = pneg %p100
      $region22: #{stem_layer_forward.2} parent=11 // pred_check_branch
        %170 = sbr.rel (%p168) target = $region24
      $region23: #{stem_layer_forward.2} parent=11 // pred_region
        _
      $region24: #{stem_layer_forward.2} parent=11 // pred_fallthru
        _
      // Predicated region
      $region25: #{stem_layer_forward.2} parent=11 // pred_check
        %p171 = pneg %p121
      $region26: #{stem_layer_forward.2} parent=11 // pred_check_branch
        %173 = sbr.rel (%p171) target = $region28
      $region27: #{stem_layer_forward.2} parent=11 // pred_region
        _
      $region28: #{stem_layer_forward.2} parent=11 // pred_fallthru
        _
    $region12: #{stem_layer_forward.2} parent=5 // pred_fallthru
      _
    %p174 = scmp.lt.s32.totalorder %s11, 2
    // Predicated region
    $region29: #{stem_layer_forward.2} parent=5 // pred_check
      %p175 = pneg %p174
    $region30: #{stem_layer_forward.2} parent=5 // pred_check_branch
      %177 = sbr.rel (%p175) target = $region32
    $region31: #{stem_layer_forward.2} parent=5 // pred_region
      // Predicated region
      $region33: #{stem_layer_forward.2} parent=31 // pred_check
        %p178 = pneg %p31
      $region34: #{stem_layer_forward.2} parent=31 // pred_check_branch
        %180 = sbr.rel (%p178) target = $region36
      $region35: #{stem_layer_forward.2} parent=31 // pred_region
        %s181 = smul.u32 8, %s11
        %p182 = scmp.lt.s32.totalorder %s181, 15
        %s183 = scalar_select %p182, %s181, 15
        %s184 = smul.addr %s183, 4
        %s185 = scalar_lea.vmem %s0, %s184
        %s186 = smul.u32 8, %s11
      $region36: #{stem_layer_forward.2} parent=31 // pred_fallthru
        _
    $region32: #{stem_layer_forward.2} parent=5 // pred_fallthru
      _
    %p187 = scmp.le.s32.totalorder 1, %s11
    %p188 = scmp.lt.s32.totalorder %s11, 3
    %p189 = pnand %p187, %p188
    %p190 = pneg %p189
    // Predicated region
    $region37: #{stem_layer_forward.2} parent=5 // pred_check
      _
    $region38: #{stem_layer_forward.2} parent=5 // pred_check_branch
      %192 = sbr.rel (%p189) target = $region40
    $region39: #{stem_layer_forward.2} parent=5 // pred_region
      %s193 = ssub.s32 %s11, 1
      %s194 = smul.u32 8, %s16
      %p195 = scmp.lt.s32.totalorder %s194, 15
      %s196 = scalar_select %p195, %s194, 15
      %s197 = smul.addr %s196, 4
      %s198 = scalar_lea.vmem %s0, %s197
      %p199 = pneg %p37
      %p200 = pneg %p34
      %p201 = pneg %p58
      %p202 = pneg %p55
      %p203 = pneg %p79
      %p204 = pneg %p76
      %p205 = pneg %p100
      %p206 = pneg %p97
      %p207 = pneg %p121
      %p208 = pneg %p118
      %p209 = pneg %p147
      %p210 = pneg %p144
      %s211 = smul.u32 8, %s16
      %p212 = scmp.lt.s32.totalorder %s211, 15
      %s213 = scalar_select %p212, %s211, 15
      %s214 = smul.addr %s213, 4
      %s215 = scalar_lea.vmem %s5, %s214
      %s216 = smul.u32 8, %s16
      %p217 = scmp.lt.s32.totalorder %s216, 15
      %s218 = scalar_select %p217, %s216, 15
      %s219 = smul.addr %s218, 4
      %s220 = scalar_lea.vmem %s0, %s219
      %s221 = smul.u32 8, %s16
      %s222 = smul.u32 8, %s16
      %p223 = scmp.lt.s32.totalorder %s222, 15
      %s224 = scalar_select %p223, %s222, 15
      %s225 = smul.addr %s224, 4
      %s226 = scalar_lea.vmem %s5, %s225
      %s227 = smul.u32 8, %s16
      %v229 = vld [vmem:[%s220] sm:$0xf]
      %v230 = vld [vmem:[%s220 + $0x4] sm:$0xf]
      %v231 = vld [vmem:[%s220 + $0x8] sm:$0xf]
      %v232 = vld [vmem:[%s220 + $0xc] sm:$0xf]
      %v233 = vld [vmem:[%s220 + $0x10] sm:$0xf]
      %v234 = vld [vmem:[%s220 + $0x14] sm:$0xf]
      %v235 = vld [vmem:[%s220 + $0x18] sm:$0xf]
      %v236 = vld [vmem:[%s220 + $0x1c] sm:$0xf]
      %v237 = vld [vmem:[%s1] sm:$0xf]
      %v238 = vld [vmem:[%s1 + $0x4] sm:$0xf]
      %v239 = vld [vmem:[%s1 + $0x8] sm:$0xf]
      %v240 = vld [vmem:[%s1 + $0xc] sm:$0x3]
      %v241 = vld [vmem:[%s2] sm:$0x1]
      %v243 = vlaneseq
      %v244 = vshrl.u32 %v243, 7
      %v245 = vsub.s32 0, %v244
      %v246 = vrot.slane %v241, %v245
      %v256 = vunpack.c.l.b16 %v229
      %v257 = vunpack.c.l.b16 %v230
      %v258 = vunpack.c.l.b16 %v231
      %v259 = vunpack.c.l.b16 %v232
      %v260 = vunpack.c.l.b16 %v233
      %v261 = vunpack.c.l.b16 %v234
      %v262 = vunpack.c.l.b16 %v235
      %v263 = vunpack.c.l.b16 %v236
      %v264 = vpack.c.b16 %v257, %v256
      %v265 = vpack.c.b16 %v259, %v258
      %v266 = vpack.c.b16 %v261, %v260
      %v267 = vpack.c.b16 %v263, %v262
      %v272 = vunpack.c.l.b16 %v237
      %v273 = vunpack.c.l.b16 %v238
      %v274 = vunpack.c.l.b16 %v239
      %v275 = vunpack.c.l.b16 %v240
      %v276 = vpack.c.b16 %v273, %v272
      %v277 = vpack.c.b16 %v275, %v274
      %vm279 = vcmask 220160
      %v281 = vsel %vm279, %v264, 0
      %v284 = vsel %vm279, %v265, 0
      %v287 = vsel %vm279, %v266, 0
      %v290 = vsel %vm279, %v267, 0
      %vm292 = vcmask 1044480
      %vm293 = vcmask 1045504
      %v294 = vsel %vm292, 4294967295, 65535
      %v295 = vsel %vm293, %v294, 0
      %v297 = vand.u32 %v277, %v295
      %299 = vmatprep.subr.bf16.mxu0 0
      %300 = vmatpush1.bf16.msra.mxu0 %v276
      %301 = vmatprep.subr.bf16.mxu0 0
      %302 = vmatpush1.bf16.msra.mxu0 %v297
      %303 = vmatprep.subr.bf16.mxu0 0
      %304 = vmatpush1.bf16.msra.mxu0 0
      %305 = vmatprep.subr.bf16.mxu0 0
      %306 = vmatpush1.bf16.msra.mxu0 0
      %307 = vmatprep.subr.bf16.mxu0 0
      %308 = vmatpush1.bf16.msra.mxu0 0
      %309 = vmatprep.subr.bf16.mxu0 0
      %310 = vmatpush1.bf16.msra.mxu0 0
      %311 = vmatprep.subr.bf16.mxu0 0
      %312 = vmatpush1.bf16.msra.mxu0 0
      %313 = vmatprep.subr.bf16.mxu0 0
      %314 = vmatpush1.bf16.msra.mxu0 0
      %315 = vmatprep.subr.bf16.mxu0 0
      %316 = vmatpush1.bf16.msra.mxu0 0
      %317 = vmatprep.subr.bf16.mxu0 0
      %318 = vmatpush1.bf16.msra.mxu0 0
      %319 = vmatprep.subr.bf16.mxu0 0
      %320 = vmatpush1.bf16.msra.mxu0 0
      %321 = vmatprep.subr.bf16.mxu0 0
      %322 = vmatpush1.bf16.msra.mxu0 0
      %323 = vmatprep.subr.bf16.mxu0 0
      %324 = vmatpush1.bf16.msra.mxu0 0
      %325 = vmatprep.subr.bf16.mxu0 0
      %326 = vmatpush1.bf16.msra.mxu0 0
      %327 = vmatprep.subr.bf16.mxu0 0
      %328 = vmatpush1.bf16.msra.mxu0 0
      %329 = vmatprep.subr.bf16.mxu0 0
      %330 = vmatpush1.bf16.msra.mxu0 0
      %331 = vmatprep.mubr.bf16.mxu0 0
      %332 = vmatmul.mubr.bf16.gmra.mrb[0].mxu0 %v281
      %v333 = vpop.f32.mrb[0].mxu0
      %v334 = vadd.f32 %v246, %v333
      %v335 = vpop.f32.mrb[0].mxu0
      %v336 = vpop.f32.mrb[0].mxu0
      %v337 = vadd.f32 %v246, %v336
      %v338 = vpop.f32.mrb[0].mxu0
      %339 = vmatprep.mubr.bf16.mxu0 0
      %340 = vmatmul.mubr.bf16.gmra.mrb[0].mxu0 %v284
      %v341 = vpop.f32.mrb[0].mxu0
      %v342 = vadd.f32 %v246, %v341
      %v343 = vpop.f32.mrb[0].mxu0
      %v344 = vpop.f32.mrb[0].mxu0
      %v345 = vadd.f32 %v246, %v344
      %v346 = vpop.f32.mrb[0].mxu0
      %347 = vmatprep.mubr.bf16.mxu0 0
      %348 = vmatmul.mubr.bf16.gmra.mrb[0].mxu0 %v287
      %v349 = vpop.f32.mrb[0].mxu0
      %v350 = vadd.f32 %v246, %v349
      %v351 = vpop.f32.mrb[0].mxu0
      %v352 = vpop.f32.mrb[0].mxu0
      %v353 = vadd.f32 %v246, %v352
      %v354 = vpop.f32.mrb[0].mxu0
      %355 = vmatprep.mubr.bf16.mxu0 0
      %356 = vmatmul.mubr.bf16.gmra.mrb[0].mxu0 %v290
      %v357 = vpop.f32.mrb[0].mxu0
      %v358 = vadd.f32 %v246, %v357
      %v359 = vpop.f32.mrb[0].mxu0
      %v360 = vpop.f32.mrb[0].mxu0
      %v361 = vadd.f32 %v246, %v360
      %v362 = vpop.f32.mrb[0].mxu0
      %363 = vdwg.mxu0
      %364 = vadd.xlane.f32.xlu0 %v334
      %v365 = vpop.xlane.xlu0 %364
      %366 = vadd.xlane.f32.xlu0 %v337
      %v367 = vpop.xlane.xlu0 %366
      %368 = vadd.xlane.f32.xlu0 %v342
      %v369 = vpop.xlane.xlu0 %368
      %370 = vadd.xlane.f32.xlu0 %v345
      %v371 = vpop.xlane.xlu0 %370
      %372 = vadd.xlane.f32.xlu0 %v350
      %v373 = vpop.xlane.xlu0 %372
      %374 = vadd.xlane.f32.xlu0 %v353
      %v375 = vpop.xlane.xlu0 %374
      %376 = vadd.xlane.f32.xlu0 %v358
      %v377 = vpop.xlane.xlu0 %376
      %378 = vadd.xlane.f32.xlu0 %v361
      %v379 = vpop.xlane.xlu0 %378
      %v380 = vmul.f32 %v365, 0.0625
      %v381 = vmul.f32 %v367, 0.0625
      %v382 = vmul.f32 %v369, 0.0625
      %v383 = vmul.f32 %v371, 0.0625
      %v384 = vmul.f32 %v373, 0.0625
      %v385 = vmul.f32 %v375, 0.0625
      %v386 = vmul.f32 %v377, 0.0625
      %v387 = vmul.f32 %v379, 0.0625
      %v388 = vmul.f32 %v334, %v334
      %v389 = vmul.f32 %v337, %v337
      %v390 = vmul.f32 %v342, %v342
      %v391 = vmul.f32 %v345, %v345
      %v392 = vmul.f32 %v350, %v350
      %v393 = vmul.f32 %v353, %v353
      %v394 = vmul.f32 %v358, %v358
      %v395 = vmul.f32 %v361, %v361
      %396 = vadd.xlane.f32.xlu0 %v388
      %v397 = vpop.xlane.xlu0 %396
      %398 = vadd.xlane.f32.xlu0 %v389
      %v399 = vpop.xlane.xlu0 %398
      %400 = vadd.xlane.f32.xlu0 %v390
      %v401 = vpop.xlane.xlu0 %400
      %402 = vadd.xlane.f32.xlu0 %v391
      %v403 = vpop.xlane.xlu0 %402
      %404 = vadd.xlane.f32.xlu0 %v392
      %v405 = vpop.xlane.xlu0 %404
      %406 = vadd.xlane.f32.xlu0 %v393
      %v407 = vpop.xlane.xlu0 %406
      %408 = vadd.xlane.f32.xlu0 %v394
      %v409 = vpop.xlane.xlu0 %408
      %410 = vadd.xlane.f32.xlu0 %v395
      %v411 = vpop.xlane.xlu0 %410
      %v412 = vmul.f32 %v397, 0.0625
      %v413 = vmul.f32 %v399, 0.0625
      %v414 = vmul.f32 %v401, 0.0625
      %v415 = vmul.f32 %v403, 0.0625
      %v416 = vmul.f32 %v405, 0.0625
      %v417 = vmul.f32 %v407, 0.0625
      %v418 = vmul.f32 %v409, 0.0625
      %v419 = vmul.f32 %v411, 0.0625
      %v420 = vmul.f32 %v380, %v380
      %v421 = vmul.f32 %v381, %v381
      %v422 = vmul.f32 %v382, %v382
      %v423 = vmul.f32 %v383, %v383
      %v424 = vmul.f32 %v384, %v384
      %v425 = vmul.f32 %v385, %v385
      %v426 = vmul.f32 %v386, %v386
      %v427 = vmul.f32 %v387, %v387
      %v428 = vsub.f32 %v412, %v420
      %v429 = vsub.f32 %v413, %v421
      %v430 = vsub.f32 %v414, %v422
      %v431 = vsub.f32 %v415, %v423
      %v432 = vsub.f32 %v416, %v424
      %v433 = vsub.f32 %v417, %v425
      %v434 = vsub.f32 %v418, %v426
      %v435 = vsub.f32 %v419, %v427
      %v436 = vmax.f32 %v428, 0.0
      %v437 = vmax.f32 %v429, 0.0
      %v438 = vmax.f32 %v430, 0.0
      %v439 = vmax.f32 %v431, 0.0
      %v440 = vmax.f32 %v432, 0.0
      %v441 = vmax.f32 %v433, 0.0
      %v442 = vmax.f32 %v434, 0.0
      %v443 = vmax.f32 %v435, 0.0
      %v444 = vsub.f32 %v334, %v380
      %v445 = vsub.f32 %v337, %v381
      %v446 = vsub.f32 %v342, %v382
      %v447 = vsub.f32 %v345, %v383
      %v448 = vsub.f32 %v350, %v384
      %v449 = vsub.f32 %v353, %v385
      %v450 = vsub.f32 %v358, %v386
      %v451 = vsub.f32 %v361, %v387
      %v452 = vadd.f32 %v436, 1e-05
      %v453 = vadd.f32 %v437, 1e-05
      %v454 = vadd.f32 %v438, 1e-05
      %v455 = vadd.f32 %v439, 1e-05
      %v456 = vadd.f32 %v440, 1e-05
      %v457 = vadd.f32 %v441, 1e-05
      %v458 = vadd.f32 %v442, 1e-05
      %v459 = vadd.f32 %v443, 1e-05
      %v460 = vrsqrt.pop %v452
      %v461 = vrsqrt.pop %v453
      %v462 = vrsqrt.pop %v454
      %v463 = vrsqrt.pop %v455
      %v464 = vrsqrt.pop %v456
      %v465 = vrsqrt.pop %v457
      %v466 = vrsqrt.pop %v458
      %v467 = vrsqrt.pop %v459
      %v468 = vmul.f32 %v444, %v460
      %v469 = vmul.f32 %v445, %v461
      %v470 = vmul.f32 %v446, %v462
      %v471 = vmul.f32 %v447, %v463
      %v472 = vmul.f32 %v448, %v464
      %v473 = vmul.f32 %v449, %v465
      %v474 = vmul.f32 %v450, %v466
      %v475 = vmul.f32 %v451, %v467
      %v476 = vld [vmem:[%s3] sm:$0x1]
      %v478 = vlaneseq
      %v479 = vshrl.u32 %v478, 7
      %v480 = vsub.s32 0, %v479
      %v481 = vrot.slane %v476, %v480
      %v483 = vmul.f32 %v468, %v481
      %v484 = vmul.f32 %v469, %v481
      %v485 = vmul.f32 %v470, %v481
      %v486 = vmul.f32 %v471, %v481
      %v487 = vmul.f32 %v472, %v481
      %v488 = vmul.f32 %v473, %v481
      %v489 = vmul.f32 %v474, %v481
      %v490 = vmul.f32 %v475, %v481
      %v491 = vld [vmem:[%s4] sm:$0x1]
      %v493 = vlaneseq
      %v494 = vshrl.u32 %v493, 7
      %v495 = vsub.s32 0, %v494
      %v496 = vrot.slane %v491, %v495
      %v498 = vadd.f32 %v483, %v496
      %v499 = vadd.f32 %v484, %v496
      %v500 = vadd.f32 %v485, %v496
      %v501 = vadd.f32 %v486, %v496
      %v502 = vadd.f32 %v487, %v496
      %v503 = vadd.f32 %v488, %v496
      %v504 = vadd.f32 %v489, %v496
      %v505 = vadd.f32 %v490, %v496
      %v506 = vmul.f32 %v498, 0.5
      %v507 = vmul.f32 %v499, 0.5
      %v508 = vmul.f32 %v500, 0.5
      %v509 = vmul.f32 %v501, 0.5
      %v510 = vmul.f32 %v502, 0.5
      %v511 = vmul.f32 %v503, 0.5
      %v512 = vmul.f32 %v504, 0.5
      %v513 = vmul.f32 %v505, 0.5
      %v514 = vmul.f32 %v498, 0.70710677
      %v515 = vmul.f32 %v499, 0.70710677
      %v516 = vmul.f32 %v500, 0.70710677
      %v517 = vmul.f32 %v501, 0.70710677
      %v518 = vmul.f32 %v502, 0.70710677
      %v519 = vmul.f32 %v503, 0.70710677
      %v520 = vmul.f32 %v504, 0.70710677
      %v521 = vmul.f32 %v505, 0.70710677
      %v522 = verf.f32.pop %v514
      %v523 = verf.f32.pop %v515
      %v524 = verf.f32.pop %v516
      %v525 = verf.f32.pop %v517
      %v526 = verf.f32.pop %v518
      %v527 = verf.f32.pop %v519
      %v528 = verf.f32.pop %v520
      %v529 = verf.f32.pop %v521
      %v530 = vadd.f32 %v522, 1.0
      %v531 = vadd.f32 %v523, 1.0
      %v532 = vadd.f32 %v524, 1.0
      %v533 = vadd.f32 %v525, 1.0
      %v534 = vadd.f32 %v526, 1.0
      %v535 = vadd.f32 %v527, 1.0
      %v536 = vadd.f32 %v528, 1.0
      %v537 = vadd.f32 %v529, 1.0
      %v538 = vmul.f32 %v506, %v530
      %v539 = vmul.f32 %v507, %v531
      %v540 = vmul.f32 %v508, %v532
      %v541 = vmul.f32 %v509, %v533
      %v542 = vmul.f32 %v510, %v534
      %v543 = vmul.f32 %v511, %v535
      %v544 = vmul.f32 %v512, %v536
      %v545 = vmul.f32 %v513, %v537
      %v546 = vpack.c.bf16 %v539, %v538
      %v547 = vpack.c.bf16 %v541, %v540
      %v548 = vpack.c.bf16 %v543, %v542
      %v549 = vpack.c.bf16 %v545, %v544
      %v554 = vunpack.c.l.b16 %v546
      %v555 = vunpack.c.h.b16 %v546
      %v556 = vunpack.c.l.b16 %v547
      %v557 = vunpack.c.h.b16 %v547
      %v558 = vunpack.c.l.b16 %v548
      %v559 = vunpack.c.h.b16 %v548
      %v560 = vunpack.c.l.b16 %v549
      %v561 = vunpack.c.h.b16 %v549
      %v562 = vpack.c.b16 %v554, %v554
      %v563 = vpack.c.b16 %v555, %v555
      %v564 = vpack.c.b16 %v556, %v556
      %v565 = vpack.c.b16 %v557, %v557
      %v566 = vpack.c.b16 %v558, %v558
      %v567 = vpack.c.b16 %v559, %v559
      %v568 = vpack.c.b16 %v560, %v560
      %v569 = vpack.c.b16 %v561, %v561
      %578 = vst [vmem:[%s226] sm:$0xf] %v562
      %579 = vst [vmem:[%s226 + $0x4] sm:$0xf] %v563
      %580 = vst [vmem:[%s226 + $0x8] sm:$0xf] %v564
      %581 = vst [vmem:[%s226 + $0xc] sm:$0xf] %v565
      %582 = vst [vmem:[%s226 + $0x10] sm:$0xf] %v566
      %583 = vst [vmem:[%s226 + $0x14] sm:$0xf] %v567
      %584 = vst [vmem:[%s226 + $0x18] sm:$0xf] %v568
      %585 = vst [vmem:[%s226 + $0x1c] sm:$0xf] %v569
      %s586 = smul.u32 8, %s16
      %p587 = scmp.lt.s32.totalorder %s586, 15
      %s588 = scalar_select %p587, %s586, 15
      %s589 = smul.addr %s588, 4
      %s590 = scalar_lea.vmem %s5, %s589
      // Predicated region
      $region41: #{stem_layer_forward.2} parent=39 // pred_check
        %p591 = pneg %p144
      $region42: #{stem_layer_forward.2} parent=39 // pred_check_branch
        %593 = sbr.rel (%p591) target = $region44
      $region43: #{stem_layer_forward.2} parent=39 // pred_region
        %s594 = smul.u32 8, %s16
      $region44: #{stem_layer_forward.2} parent=39 // pred_fallthru
        _
    $region40: #{stem_layer_forward.2} parent=5 // pred_fallthru
      _
    %p595 = scmp.le.s32.totalorder 2, %s11
    // Predicated region
    $region45: #{stem_layer_forward.2} parent=5 // pred_check
      %p596 = pneg %p595
    $region46: #{stem_layer_forward.2} parent=5 // pred_check_branch
      %598 = sbr.rel (%p596) target = $region48
    $region47: #{stem_layer_forward.2} parent=5 // pred_region
      %s599 = ssub.s32 %s11, 2
      // Predicated region
      $region49: #{stem_layer_forward.2} parent=47 // pred_check
        %p600 = pneg %p150
      $region50: #{stem_layer_forward.2} parent=47 // pred_check_branch
        %602 = sbr.rel (%p600) target = $region52
      $region51: #{stem_layer_forward.2} parent=47 // pred_region
        %s603 = smul.u32 8, %s17
        %p604 = scmp.lt.s32.totalorder %s603, 15
        %s605 = scalar_select %p604, %s603, 15
        %s606 = smul.addr %s605, 4
        %s607 = scalar_lea.vmem %s5, %s606
      $region52: #{stem_layer_forward.2} parent=47 // pred_fallthru
        _
    $region48: #{stem_layer_forward.2} parent=5 // pred_fallthru
      _
  $region6: #{stem_layer_forward.2} parent=0 // loop_footer
    %s15 = sadd.s32 1, %s11
  $region7: #{stem_layer_forward.2} parent=0 // loop_footer_branch
    %10 = sbr.rel target = $region3
  $region8: #{stem_layer_forward.2} parent=0 // loop_exit
    _

// kernel: stem_layer_forward.3
$region0: #{stem_layer_forward.3}
  #allocation0 [shape = 'u32[]', space=smem, size = 0x4, offset = 0x4, fixed_abs, tag = 'smem constant byte address 0x4 - core index']
  #allocation1 [shape = 'u32[144,128]{1,0:T(1,128)}', space=vmem, size = 0x12000, scoped, tag = 'internal scratch']
  %s0 = inlined_call_operand.vmem [shape: bf16[32,144], index: 0, kind: input, shape index: {}]
  %s1 = inlined_call_operand.vmem [shape: bf16[144,128], index: 1, kind: input, shape index: {}]
  %s2 = inlined_call_operand.vmem [shape: f32[1,128], index: 2, kind: input, shape index: {}]
  %s3 = inlined_call_operand.vmem [shape: f32[1,128], index: 3, kind: input, shape index: {}]
  %s4 = inlined_call_operand.vmem [shape: f32[1,128], index: 4, kind: input, shape index: {}]
  %s5 = inlined_call_operand.hbm [shape: f32[32,128], index: 5, kind: output, shape index: {}]
  %s6 = sld [smem:[#allocation0]]
  $region53: #{stem_layer_forward.3} parent=0
    _
  %s8 = ssub.s32 1, %s6
  %s9 = scalar_select 0, %s8, %s6
  $region1: #{stem_layer_forward.3} parent=0
    #allocation2 [shape = 'u8[16384]{0}', space=vmem, size = 0x4000, scoped, tag = 'output window, operand 0']
    #allocation3 [shape = 's32[2]{0}', space=sflag, size = 0x8, scoped, tag = 'scoped memory for stem_layer_forward.3']
    %10 = vsyncpa [#allocation3], 0
    %s11 = scalar_lea.sflag [#allocation3], 1
    %12 = vsyncpa %s11, 0
    loop: start=0, step=1, limit=4
    $region2: #{stem_layer_forward.3} parent=1 // loop_pre_header
      _
    $region3: #{stem_layer_forward.3} parent=1 // loop_header
      %s14 = sphi 0, %s18
      %p15 = scmp.ge.s32.totalorder %s14, 4
      %s24 = sphi 0, %s26
      %s27 = sphi 0, %s24
      %s28 = sphi 0, %s27
      %s44 = sphi 0, %s28
      %s48 = sphi 0, %s48
      %s50 = sphi 0, %s48
      %s51 = sphi 0, %s50
      %s65 = sphi 0, %s51
      %s69 = sphi 0, %s69
      %s71 = sphi 0, %s69
      %s72 = sphi 0, %s71
      %s86 = sphi 0, %s72
      %s90 = sphi 0, %s90
      %s92 = sphi 0, %s90
      %s93 = sphi 0, %s92
      %s107 = sphi 0, %s93
      %s111 = sphi 0, %s111
      %s113 = sphi 0, %s111
      %s114 = sphi 0, %s113
      %s128 = sphi 0, %s114
      %s134 = sphi 0, %s136
      %s137 = sphi 0, %s134
      %s138 = sphi 0, %s137
      %s154 = sphi 0, %s138
    $region4: #{stem_layer_forward.3} parent=1 // loop_header_branch
      %17 = sbr.rel (%p15) target = $region8
    $region5: #{stem_layer_forward.3} parent=1 // loop_body
      %s19 = ssub.s32 %s14, 1
      %s20 = ssub.s32 %s14, 2
      %s21 = sadd.s32 %s14, 1
      %s22 = ssub.s32 %s14, %s21
      %p23 = scmp.eq.s32.totalorder %s22, 0
      %s25 = sadd.s32 %s24, 1
      %s26 = scalar_select %p23, %s24, %s25
      %p29 = pneg %p23
      %p30 = scmp.eq.s32.totalorder %s14, 1
      %p31 = por %p29, %p30
      %p32 = scmp.ne.s32.totalorder %s24, %s27
      %p33 = scmp.eq.s32.totalorder %s14, 0
      %p34 = por %p32, %p33
      %p35 = scmp.ne.s32.totalorder %s24, %s27
      %p36 = scmp.eq.s32.totalorder %s19, 1
      %p37 = por %p35, %p36
      %p38 = scmp.ne.s32.totalorder %s27, %s28
      %p39 = scmp.eq.s32.totalorder %s19, 0
      %p40 = por %p38, %p39
      %p41 = scmp.ne.s32.totalorder %s27, %s28
      %p42 = scmp.eq.s32.totalorder %s20, 1
      %p43 = por %p41, %p42
      %p45 = scmp.ne.s32.totalorder %s28, %s44
      %p46 = scmp.eq.s32.totalorder %s20, 0
      %p47 = por %p45, %p46
      %s49 = sadd.s32 %s48, 1
      %p52 = scmp.eq.s32.totalorder %s14, 1
      %p53 = scmp.ne.s32.totalorder %s48, %s50
      %p54 = scmp.eq.s32.totalorder %s14, 0
      %p55 = por %p53, %p54
      %p56 = scmp.ne.s32.totalorder %s48, %s50
      %p57 = scmp.eq.s32.totalorder %s19, 1
      %p58 = por %p56, %p57
      %p59 = scmp.ne.s32.totalorder %s50, %s51
      %p60 = scmp.eq.s32.totalorder %s19, 0
      %p61 = por %p59, %p60
      %p62 = scmp.ne.s32.totalorder %s50, %s51
      %p63 = scmp.eq.s32.totalorder %s20, 1
      %p64 = por %p62, %p63
      %p66 = scmp.ne.s32.totalorder %s51, %s65
      %p67 = scmp.eq.s32.totalorder %s20, 0
      %p68 = por %p66, %p67
      %s70 = sadd.s32 %s69, 1
      %p73 = scmp.eq.s32.totalorder %s14, 1
      %p74 = scmp.ne.s32.totalorder %s69, %s71
      %p75 = scmp.eq.s32.totalorder %s14, 0
      %p76 = por %p74, %p75
      %p77 = scmp.ne.s32.totalorder %s69, %s71
      %p78 = scmp.eq.s32.totalorder %s19, 1
      %p79 = por %p77, %p78
      %p80 = scmp.ne.s32.totalorder %s71, %s72
      %p81 = scmp.eq.s32.totalorder %s19, 0
      %p82 = por %p80, %p81
      %p83 = scmp.ne.s32.totalorder %s71, %s72
      %p84 = scmp.eq.s32.totalorder %s20, 1
      %p85 = por %p83, %p84
      %p87 = scmp.ne.s32.totalorder %s72, %s86
      %p88 = scmp.eq.s32.totalorder %s20, 0
      %p89 = por %p87, %p88
      %s91 = sadd.s32 %s90, 1
      %p94 = scmp.eq.s32.totalorder %s14, 1
      %p95 = scmp.ne.s32.totalorder %s90, %s92
      %p96 = scmp.eq.s32.totalorder %s14, 0
      %p97 = por %p95, %p96
      %p98 = scmp.ne.s32.totalorder %s90, %s92
      %p99 = scmp.eq.s32.totalorder %s19, 1
      %p100 = por %p98, %p99
      %p101 = scmp.ne.s32.totalorder %s92, %s93
      %p102 = scmp.eq.s32.totalorder %s19, 0
      %p103 = por %p101, %p102
      %p104 = scmp.ne.s32.totalorder %s92, %s93
      %p105 = scmp.eq.s32.totalorder %s20, 1
      %p106 = por %p104, %p105
      %p108 = scmp.ne.s32.totalorder %s93, %s107
      %p109 = scmp.eq.s32.totalorder %s20, 0
      %p110 = por %p108, %p109
      %s112 = sadd.s32 %s111, 1
      %p115 = scmp.eq.s32.totalorder %s14, 1
      %p116 = scmp.ne.s32.totalorder %s111, %s113
      %p117 = scmp.eq.s32.totalorder %s14, 0
      %p118 = por %p116, %p117
      %p119 = scmp.ne.s32.totalorder %s111, %s113
      %p120 = scmp.eq.s32.totalorder %s19, 1
      %p121 = por %p119, %p120
      %p122 = scmp.ne.s32.totalorder %s113, %s114
      %p123 = scmp.eq.s32.totalorder %s19, 0
      %p124 = por %p122, %p123
      %p125 = scmp.ne.s32.totalorder %s113, %s114
      %p126 = scmp.eq.s32.totalorder %s20, 1
      %p127 = por %p125, %p126
      %p129 = scmp.ne.s32.totalorder %s114, %s128
      %p130 = scmp.eq.s32.totalorder %s20, 0
      %p131 = por %p129, %p130
      %s132 = ssub.s32 %s14, %s21
      %p133 = scmp.eq.s32.totalorder %s132, 0
      %s135 = sadd.s32 %s134, 1
      %s136 = scalar_select %p133, %s134, %s135
      %p139 = pneg %p133
      %p140 = scmp.eq.s32.totalorder %s14, 1
      %p141 = por %p139, %p140
      %p142 = scmp.ne.s32.totalorder %s134, %s137
      %p143 = scmp.eq.s32.totalorder %s14, 0
      %p144 = por %p142, %p143
      %p145 = scmp.ne.s32.totalorder %s134, %s137
      %p146 = scmp.eq.s32.totalorder %s19, 1
      %p147 = por %p145, %p146
      %p148 = scmp.ne.s32.totalorder %s137, %s138
      %p149 = scmp.eq.s32.totalorder %s19, 0
      %p150 = por %p148, %p149
      %p151 = scmp.ne.s32.totalorder %s137, %s138
      %p152 = scmp.eq.s32.totalorder %s20, 1
      %p153 = por %p151, %p152
      %p155 = scmp.ne.s32.totalorder %s138, %s154
      %p156 = scmp.eq.s32.totalorder %s20, 0
      %p157 = por %p155, %p156
      %p158 = scmp.le.s32.totalorder 1, %s14
      %p159 = scmp.lt.s32.totalorder %s14, 3
      %p160 = pnand %p158, %p159
      %p161 = pneg %p160
      // Predicated region
      $region9: #{stem_layer_forward.3} parent=5 // pred_check
        _
      $region10: #{stem_layer_forward.3} parent=5 // pred_check_branch
        %163 = sbr.rel (%p160) target = $region12
      $region11: #{stem_layer_forward.3} parent=5 // pred_region
        %s164 = ssub.s32 %s14, 1
        // Predicated region
        $region13: #{stem_layer_forward.3} parent=11 // pred_check
          %p165 = pneg %p61
        $region14: #{stem_layer_forward.3} parent=11 // pred_check_branch
          %167 = sbr.rel (%p165) target = $region16
        $region15: #{stem_layer_forward.3} parent=11 // pred_region
          _
        $region16: #{stem_layer_forward.3} parent=11 // pred_fallthru
          _
        // Predicated region
        $region17: #{stem_layer_forward.3} parent=11 // pred_check
          %p168 = pneg %p82
        $region18: #{stem_layer_forward.3} parent=11 // pred_check_branch
          %170 = sbr.rel (%p168) target = $region20
        $region19: #{stem_layer_forward.3} parent=11 // pred_region
          _
        $region20: #{stem_layer_forward.3} parent=11 // pred_fallthru
          _
        // Predicated region
        $region21: #{stem_layer_forward.3} parent=11 // pred_check
          %p171 = pneg %p103
        $region22: #{stem_layer_forward.3} parent=11 // pred_check_branch
          %173 = sbr.rel (%p171) target = $region24
        $region23: #{stem_layer_forward.3} parent=11 // pred_region
          _
        $region24: #{stem_layer_forward.3} parent=11 // pred_fallthru
          _
        // Predicated region
        $region25: #{stem_layer_forward.3} parent=11 // pred_check
          %p174 = pneg %p124
        $region26: #{stem_layer_forward.3} parent=11 // pred_check_branch
          %176 = sbr.rel (%p174) target = $region28
        $region27: #{stem_layer_forward.3} parent=11 // pred_region
          _
        $region28: #{stem_layer_forward.3} parent=11 // pred_fallthru
          _
      $region12: #{stem_layer_forward.3} parent=5 // pred_fallthru
        _
      %p177 = scmp.lt.s32.totalorder %s14, 2
      // Predicated region
      $region29: #{stem_layer_forward.3} parent=5 // pred_check
        %p178 = pneg %p177
      $region30: #{stem_layer_forward.3} parent=5 // pred_check_branch
        %180 = sbr.rel (%p178) target = $region32
      $region31: #{stem_layer_forward.3} parent=5 // pred_region
        // Predicated region
        $region33: #{stem_layer_forward.3} parent=31 // pred_check
          %p181 = pneg %p34
        $region34: #{stem_layer_forward.3} parent=31 // pred_check_branch
          %183 = sbr.rel (%p181) target = $region36
        $region35: #{stem_layer_forward.3} parent=31 // pred_region
          %s184 = smul.u32 2, %s14
          %p185 = scmp.lt.s32.totalorder %s184, 3
          %s186 = scalar_select %p185, %s184, 3
          %s187 = smul.addr %s186, 2
          %s188 = smul.addr %s187, 4
          %s189 = scalar_lea.vmem %s0, %s188
          %s190 = smul.u32 2, %s14
        $region36: #{stem_layer_forward.3} parent=31 // pred_fallthru
          _
      $region32: #{stem_layer_forward.3} parent=5 // pred_fallthru
        _
      %p191 = scmp.le.s32.totalorder 1, %s14
      %p192 = scmp.lt.s32.totalorder %s14, 3
      %p193 = pnand %p191, %p192
      %p194 = pneg %p193
      // Predicated region
      $region37: #{stem_layer_forward.3} parent=5 // pred_check
        _
      $region38: #{stem_layer_forward.3} parent=5 // pred_check_branch
        %196 = sbr.rel (%p193) target = $region40
      $region39: #{stem_layer_forward.3} parent=5 // pred_region
        %s197 = ssub.s32 %s14, 1
        %s198 = smul.u32 2, %s19
        %p199 = scmp.lt.s32.totalorder %s198, 3
        %s200 = scalar_select %p199, %s198, 3
        %s201 = smul.addr %s200, 2
        %s202 = smul.addr %s201, 4
        %s203 = scalar_lea.vmem %s0, %s202
        %p204 = pneg %p40
        %p205 = pneg %p37
        %p206 = pneg %p61
        %p207 = pneg %p58
        %p208 = pneg %p82
        %p209 = pneg %p79
        %p210 = pneg %p103
        %p211 = pneg %p100
        %p212 = pneg %p124
        %p213 = pneg %p121
        %p214 = pneg %p150
        %p215 = pneg %p147
        %s216 = sand.u32 %s137, 1
        %s217 = scalar_lea.sflag [#allocation3], %s216
        %s218 = sand.u32 %s137, 1
        %s219 = smul.addr %s218, 16
        %s220 = scalar_lea.vmem [#allocation2], %s219
        %s221 = smul.u32 2, %s19
        %p222 = scmp.lt.s32.totalorder %s221, 3
        %s223 = scalar_select %p222, %s221, 3
        %s224 = smul.addr %s223, 2
        %s225 = smul.addr %s224, 4
        %s226 = scalar_lea.vmem %s0, %s225
        %s227 = smul.u32 2, %s19
        %s228 = smul.u32 2, %s19
        %v230 = vld [vmem:[%s226] sm:$0xff]
        %v231 = vld [vmem:[%s226 + $0x8] sm:$0xff]
        %v232 = vld [vmem:[%s1] sm:$0xf]
        %v233 = vld [vmem:[%s1 + $0x4] sm:$0xf]
        %v234 = vld [vmem:[%s1 + $0x8] sm:$0xf]
        %v235 = vld [vmem:[%s1 + $0xc] sm:$0xf]
        %v236 = vld [vmem:[%s1 + $0x10] sm:$0xf]
        %v237 = vld [vmem:[%s1 + $0x14] sm:$0xf]
        %v238 = vld [vmem:[%s1 + $0x18] sm:$0xf]
        %v239 = vld [vmem:[%s1 + $0x1c] sm:$0xf]
        %v240 = vld [vmem:[%s1 + $0x20] sm:$0xf]
        %v241 = vld [vmem:[%s1 + $0x24] sm:$0xf]
        %v242 = vld [vmem:[%s1 + $0x28] sm:$0xf]
        %v243 = vld [vmem:[%s1 + $0x2c] sm:$0xf]
        %v244 = vld [vmem:[%s1 + $0x30] sm:$0xf]
        %v245 = vld [vmem:[%s1 + $0x34] sm:$0xf]
        %v246 = vld [vmem:[%s1 + $0x38] sm:$0xf]
        %v247 = vld [vmem:[%s1 + $0x3c] sm:$0xf]
        %v248 = vld [vmem:[%s1 + $0x40] sm:$0xf]
        %v249 = vld [vmem:[%s1 + $0x44] sm:$0xf]
        %v250 = vld [vmem:[%s2] sm:$0x1]
        %v252 = vlaneseq
        %v253 = vshrl.u32 %v252, 7
        %v254 = vsub.s32 0, %v253
        %v255 = vrot.slane %v250, %v254
        %v259 = vunpack.c.l.b16 %v230
        %v260 = vunpack.c.h.b16 %v230
        %v261 = vunpack.c.l.b16 %v231
        %v262 = vunpack.c.h.b16 %v231
        %v263 = vpack.c.b16 %v261, %v259
        %v264 = vpack.c.b16 %v262, %v260
        %v284 = vunpack.c.l.b16 %v232
        %v285 = vunpack.c.l.b16 %v233
        %v286 = vunpack.c.l.b16 %v234
        %v287 = vunpack.c.l.b16 %v235
        %v288 = vunpack.c.l.b16 %v236
        %v289 = vunpack.c.l.b16 %v237
        %v290 = vunpack.c.l.b16 %v238
        %v291 = vunpack.c.l.b16 %v239
        %v292 = vunpack.c.l.b16 %v240
        %v293 = vunpack.c.l.b16 %v241
        %v294 = vunpack.c.l.b16 %v242
        %v295 = vunpack.c.l.b16 %v243
        %v296 = vunpack.c.l.b16 %v244
        %v297 = vunpack.c.l.b16 %v245
        %v298 = vunpack.c.l.b16 %v246
        %v299 = vunpack.c.l.b16 %v247
        %v300 = vunpack.c.l.b16 %v248
        %v301 = vunpack.c.l.b16 %v249
        %v302 = vpack.c.b16 %v285, %v284
        %v303 = vpack.c.b16 %v287, %v286
        %v304 = vpack.c.b16 %v289, %v288
        %v305 = vpack.c.b16 %v291, %v290
        %v306 = vpack.c.b16 %v293, %v292
        %v307 = vpack.c.b16 %v295, %v294
        %v308 = vpack.c.b16 %v297, %v296
        %v309 = vpack.c.b16 %v299, %v298
        %v310 = vpack.c.b16 %v301, %v300
        %vm320 = vcmask 130048
        %v322 = vsel %vm320, %v264, 0
        %324 = vmatprep.subr.bf16.mxu0 0
        %325 = vmatpush1.bf16.msra.mxu0 %v302
        %326 = vmatprep.subr.bf16.mxu0 0
        %327 = vmatpush1.bf16.msra.mxu0 %v303
        %328 = vmatprep.subr.bf16.mxu0 0
        %329 = vmatpush1.bf16.msra.mxu0 %v304
        %330 = vmatprep.subr.bf16.mxu0 0
        %331 = vmatpush1.bf16.msra.mxu0 %v305
        %332 = vmatprep.subr.bf16.mxu0 0
        %333 = vmatpush1.bf16.msra.mxu0 %v306
        %334 = vmatprep.subr.bf16.mxu0 0
        %335 = vmatpush1.bf16.msra.mxu0 %v307
        %336 = vmatprep.subr.bf16.mxu0 0
        %337 = vmatpush1.bf16.msra.mxu0 %v308
        %338 = vmatprep.subr.bf16.mxu0 0
        %339 = vmatpush1.bf16.msra.mxu0 %v309
        %340 = vmatprep.subr.bf16.mxu0 0
        %341 = vmatpush1.bf16.msra.mxu0 %v310
        %342 = vmatprep.subr.bf16.mxu0 0
        %343 = vmatpush1.bf16.msra.mxu0 0
        %344 = vmatprep.subr.bf16.mxu0 0
        %345 = vmatpush1.bf16.msra.mxu0 0
        %346 = vmatprep.subr.bf16.mxu0 0
        %347 = vmatpush1.bf16.msra.mxu0 0
        %348 = vmatprep.subr.bf16.mxu0 0
        %349 = vmatpush1.bf16.msra.mxu0 0
        %350 = vmatprep.subr.bf16.mxu0 0
        %351 = vmatpush1.bf16.msra.mxu0 0
        %352 = vmatprep.subr.bf16.mxu0 0
        %353 = vmatpush1.bf16.msra.mxu0 0
        %354 = vmatprep.subr.bf16.mxu0 0
        %355 = vmatpush1.bf16.msra.mxu0 0
        %356 = vmatprep.mubr.bf16.mxu0 %v322
        %357 = vmatmul.mubr.bf16.gmra.mrb[0].mxu0 %v263
        %v358 = vpop.f32.mrb[0].mxu0
        %v359 = vadd.f32 %v255, %v358
        %v360 = vpop.f32.mrb[0].mxu0
        %v361 = vpop.f32.mrb[0].mxu0
        %v362 = vadd.f32 %v255, %v361
        %v363 = vpop.f32.mrb[0].mxu0
        %364 = vdwg.mxu0
        %365 = vadd.xlane.f32.xlu0 %v359
        %v366 = vpop.xlane.xlu0 %365
        %367 = vadd.xlane.f32.xlu0 %v362
        %v368 = vpop.xlane.xlu0 %367
        %v369 = vmul.f32 %v366, 0.03125
        %v370 = vmul.f32 %v368, 0.03125
        %v371 = vmul.f32 %v359, %v359
        %v372 = vmul.f32 %v362, %v362
        %373 = vadd.xlane.f32.xlu0 %v371
        %v374 = vpop.xlane.xlu0 %373
        %375 = vadd.xlane.f32.xlu0 %v372
        %v376 = vpop.xlane.xlu0 %375
        %v377 = vmul.f32 %v374, 0.03125
        %v378 = vmul.f32 %v376, 0.03125
        %v379 = vmul.f32 %v369, %v369
        %v380 = vmul.f32 %v370, %v370
        %v381 = vsub.f32 %v377, %v379
        %v382 = vsub.f32 %v378, %v380
        %v383 = vmax.f32 %v381, 0.0
        %v384 = vmax.f32 %v382, 0.0
        %v385 = vsub.f32 %v359, %v369
        %v386 = vsub.f32 %v362, %v370
        %v387 = vadd.f32 %v383, 1e-05
        %v388 = vadd.f32 %v384, 1e-05
        %v389 = vrsqrt.pop %v387
        %v390 = vrsqrt.pop %v388
        %v391 = vmul.f32 %v385, %v389
        %v392 = vmul.f32 %v386, %v390
        %v393 = vld [vmem:[%s3] sm:$0x1]
        %v395 = vlaneseq
        %v396 = vshrl.u32 %v395, 7
        %v397 = vsub.s32 0, %v396
        %v398 = vrot.slane %v393, %v397
        %v400 = vmul.f32 %v391, %v398
        %v401 = vmul.f32 %v392, %v398
        %v402 = vld [vmem:[%s4] sm:$0x1]
        %v404 = vlaneseq
        %v405 = vshrl.u32 %v404, 7
        %v406 = vsub.s32 0, %v405
        %v407 = vrot.slane %v402, %v406
        %v409 = vadd.f32 %v400, %v407
        %v410 = vadd.f32 %v401, %v407
        %v411 = vmul.f32 %v409, 0.5
        %v412 = vmul.f32 %v410, 0.5
        %v413 = vmul.f32 %v409, 0.70710677
        %v414 = vmul.f32 %v410, 0.70710677
        %v415 = verf.f32.pop %v413
        %v416 = verf.f32.pop %v414
        %v417 = vadd.f32 %v415, 1.0
        %v418 = vadd.f32 %v416, 1.0
        %v419 = vmul.f32 %v411, %v417
        %v420 = vmul.f32 %v412, %v418
        %421 = vst [vmem:[%s220] sm:$0xff] %v419
        %422 = vst [vmem:[%s220 + $0x8] sm:$0xff] %v420
        %s423 = sand.u32 %s137, 1
        %s424 = scalar_lea.sflag [#allocation3], %s423
        %s425 = sand.u32 %s137, 1
        %s426 = smul.addr %s425, 16
        %s427 = scalar_lea.vmem [#allocation2], %s426
        // Predicated region
        $region41: #{stem_layer_forward.3} parent=39 // pred_check
          %p428 = pneg %p147
        $region42: #{stem_layer_forward.3} parent=39 // pred_check_branch
          %430 = sbr.rel (%p428) target = $region44
        $region43: #{stem_layer_forward.3} parent=39 // pred_region
          %s431 = smul.u32 2, %s19
          %s433 = ssub.s32 256, 256
          %434 = vsyncadd %s424, %s433
          %s435 = smul.addr %s431, 128
          %s436 = scalar_lea.hbm %s5, %s435
          %s437 = sshll.u32 %s427, 4
          %s438 = int_to_ptr.vmem [resolvable:$true] %s437
          %443 = dma.vmem_to_hbm [thread:$0]  %s438, 256, %s436, %s424, 128, 128, 8
        $region44: #{stem_layer_forward.3} parent=39 // pred_fallthru
          _
      $region40: #{stem_layer_forward.3} parent=5 // pred_fallthru
        _
      %p444 = scmp.le.s32.totalorder 2, %s14
      // Predicated region
      $region45: #{stem_layer_forward.3} parent=5 // pred_check
        %p445 = pneg %p444
      $region46: #{stem_layer_forward.3} parent=5 // pred_check_branch
        %447 = sbr.rel (%p445) target = $region48
      $region47: #{stem_layer_forward.3} parent=5 // pred_region
        %s448 = ssub.s32 %s14, 2
        // Predicated region
        $region49: #{stem_layer_forward.3} parent=47 // pred_check
          %p449 = pneg %p153
        $region50: #{stem_layer_forward.3} parent=47 // pred_check_branch
          %451 = sbr.rel (%p449) target = $region52
        $region51: #{stem_layer_forward.3} parent=47 // pred_region
          %s452 = sand.u32 %s138, 1
          %s453 = scalar_lea.sflag [#allocation3], %s452
          %s454 = sand.u32 %s138, 1
          %s455 = smul.addr %s454, 16
          %s456 = scalar_lea.vmem [#allocation2], %s455
          %457 = dma.done %s453, 256
        $region52: #{stem_layer_forward.3} parent=47 // pred_fallthru
          _
      $region48: #{stem_layer_forward.3} parent=5 // pred_fallthru
        _
    $region6: #{stem_layer_forward.3} parent=1 // loop_footer
      %s18 = sadd.s32 1, %s14
    $region7: #{stem_layer_forward.3} parent=1 // loop_footer_branch
      %13 = sbr.rel target = $region3
    $region8: #{stem_layer_forward.3} parent=1 // loop_exit
      _
    %458 = vsyncpa [#allocation3], 1
    %s459 = scalar_lea.sflag [#allocation3], 1
    %460 = vsyncpa %s459, 1

</llo_original>
